<compile_context>
chip_gen: v6e
topology: v6e:2x2x1
jax: 0.10.0
libtpu: 0.0.40
codegen_flags: <defaults>
</compile_context>

<pallas_src>
import functools

import jax
import jax.numpy as jnp
from jax import lax
from jax.experimental import pallas as pl
from jax.experimental.pallas import tpu as pltpu


def _hmlc_kernel(labc_row_ref, labf_row_ref, labc_col_ref, labf_col_ref,
                 q_ref, k_ref, out_c_ref, out_f_ref, *, inv_temperature):
    """One row-tile of the HMLC forward (contrast_mode='all', anchor == contrast).

    labc_row_ref : [TR, Lc] int32  row-tile of tiled coarse labels
    labf_row_ref : [TR, Lf] int32  row-tile of tiled fine labels
    labc_col_ref : [Lc, N]  int32  full tiled coarse labels, lane-major
    labf_col_ref : [Lf, N]  int32  full tiled fine labels, lane-major
    q_ref        : [TR, D]  f32    row-tile of contrast features (anchors)
    k_ref        : [N, D]   f32    full contrast features (resident across the grid)
    out_c_ref    : [TR, 1]  f32    per-row mean_log_prob_pos, coarse layer
    out_f_ref    : [TR, 1]  f32    per-row mean_log_prob_pos, fine layer
    """
    q = q_ref[...].astype(jnp.float32)                 # [TR, D]
    k = k_ref[...].astype(jnp.float32)                 # [N, D]

    # Fold 1/temperature into the small LHS operand (TR*D mults, not TR*N).
    qs = q * inv_temperature                           # [TR, D]

    # anchor @ contrast^T: contract both on the shared last (lane) dim, so the MXU
    # consumes the transposed-RHS form directly (no explicit transpose buffer).
    s = lax.dot_general(qs, k, dimension_numbers=(((1,), (1,)), ((), ())),
                        preferred_element_type=jnp.float32)        # [TR, N]

    row_max = jnp.max(s, axis=1, keepdims=True)                    # [TR, 1]
    logits = s - row_max                                           # [TR, N]

    # Diagonal of s for this row tile: anchor == contrast, so s[r, i*TR + r] = qs[r].q[r].
    diag_logits = jnp.sum(qs * q, axis=1, keepdims=True) - row_max  # [TR, 1]

    # Self-contrast exclusion without eye()/iota masks:
    #   denom_i = sum_{j != i} exp(logits_ij) = sum_j exp(logits_ij) - exp(diag_i)
    e = jnp.exp(logits)                                            # only TR*N transcendentals
    log_denom = jnp.log(jnp.sum(e, axis=1, keepdims=True) - jnp.exp(diag_logits))

    def layer(lab_row_ref, lab_col_ref, out_ref):
        # Label-equality mask rebuilt in-kernel: m[r, j] = all_l(lab_row[r, l] == lab_col[l, j]).
        # Diagonal entries are always 1, so they are removed analytically below.
        n_lab = lab_row_ref.shape[1]
        eq = None
        for l in range(n_lab):                          # static, unrolled; L is tiny
            rl = lab_row_ref[:, l:l + 1]                # [TR, 1]
            cl = lab_col_ref[l:l + 1, :]                # [1, N]
            el = rl == cl                               # [TR, N] broadcast compare (VPU)
            eq = el if eq is None else (eq & el)

        # mean_log_prob_pos without materializing log_prob and without a logits_mask:
        #   sum_{j != i} m*(logits - log_denom)
        #     = (sum_j m*logits - diag_logits) - log_denom * (sum_j m - 1)
        den = jnp.sum(eq.astype(jnp.float32), axis=1, keepdims=True) - 1.0
        num = jnp.sum(jnp.where(eq, logits, 0.0), axis=1, keepdims=True) - diag_logits
        out_ref[...] = (num - log_denom * den) / (den + 1e-6)

    layer(labc_row_ref, labc_col_ref, out_c_ref)
    layer(labf_row_ref, labf_col_ref, out_f_ref)


def _as_2d_int32(labels):
    labels = jnp.asarray(labels)
    if labels.ndim == 1:
        labels = labels[:, None]
    return labels.astype(jnp.int32)


def _pick_row_tile(n, d, n_lab, vmem_budget_bytes):
    """Largest row tile (<= 256, multiple of 8) whose working set fits the VMEM budget."""
    if n <= 256:
        return n                                  # single tile; block == full array on rows
    fixed = 2 * (n * d + n * n_lab) * 4           # resident contrast features + labels (x2 bufs)
    tr = 256
    while tr > 8:
        live = (6 * tr * n + 4 * tr * d) * 4      # ~6 [tr, n] f32 temporaries + q/out buffers
        if fixed + live <= vmem_budget_bytes:
            break
        tr //= 2
    return tr


def hmlc_loss(features, coarse_labels, fine_grained_labels,
              temperature=1.0, base_temperature=1.0,
              vmem_budget_bytes=24 * 1024 * 1024):
    """HMLC forward (loss_type='hmce', layer_penalty=1/2**l, contrast_mode='all')."""
    if features.ndim < 3:
        raise ValueError("`features` must be [bsz, n_views, ...]")
    if features.ndim > 3:
        features = features.reshape(features.shape[0], features.shape[1], -1)

    b, v, d = features.shape
    n = v * b

    # contrast_feature = torch.cat(torch.unbind(features, dim=1), dim=0)  (row index v*B + b)
    contrast_feature = jnp.swapaxes(features, 0, 1).reshape(n, d).astype(jnp.float32)
    # NOTE: the similarity matmul is kept in f32 to match the reference to <=1e-5; a bf16
    # MXU path (f32 accumulation) is a further ~3x MXU win at large N*D with ~1e-3 tolerance.

    # Tiny tiled label arrays (row v*B+b == labels[b]); both layouts so the in-kernel mask
    # build needs only broadcast compares (no in-kernel transpose or gather).
    lab_c = jnp.tile(_as_2d_int32(coarse_labels), (v, 1))        # [N, Lc]
    lab_f = jnp.tile(_as_2d_int32(fine_grained_labels), (v, 1))  # [N, Lf]
    lab_c_t = lab_c.T                                            # [Lc, N]
    lab_f_t = lab_f.T                                            # [Lf, N]
    lc = lab_c.shape[1]
    lf = lab_f.shape[1]

    tr = _pick_row_tile(n, d, lc + lf, vmem_budget_bytes)
    grid = (pl.cdiv(n, tr),)

    kernel = functools.partial(_hmlc_kernel, inv_temperature=1.0 / float(temperature))

    cost = pl.CostEstimate(
        flops=2 * n * n * d + 16 * n * n,
        transcendentals=n * n + 3 * n,
        bytes_accessed=2 * n * d * 4 + 2 * n * (lc + lf) * 4 + 2 * n * 4,
    )

    mlpp_c, mlpp_f = pl.pallas_call(
        kernel,
        grid=grid,
        in_specs=[
            pl.BlockSpec((tr, lc), lambda i: (i, 0)),   # coarse labels, row tile
            pl.BlockSpec((tr, lf), lambda i: (i, 0)),   # fine labels, row tile
            pl.BlockSpec((lc, n), lambda i: (0, 0)),    # coarse labels, full (lane-major)
            pl.BlockSpec((lf, n), lambda i: (0, 0)),    # fine labels, full (lane-major)
            pl.BlockSpec((tr, d), lambda i: (i, 0)),    # anchor row tile
            pl.BlockSpec((n, d), lambda i: (0, 0)),     # full contrast features (resident)
        ],
        out_specs=[
            pl.BlockSpec((tr, 1), lambda i: (i, 0)),
            pl.BlockSpec((tr, 1), lambda i: (i, 0)),
        ],
        out_shape=[
            jax.ShapeDtypeStruct((n, 1), jnp.float32),
            jax.ShapeDtypeStruct((n, 1), jnp.float32),
        ],
        compiler_params=pltpu.CompilerParams(
            dimension_semantics=("parallel",),
            vmem_limit_bytes=32 * 1024 * 1024,          # safe on v5e/v6e/v7x; raises v5e's 16 MiB default
        ),
        cost_estimate=cost,
    )(lab_c, lab_f, lab_c_t, lab_f_t, contrast_feature, contrast_feature)

    # Tiny O(N)/O(1) epilogue: per-layer SupCon losses and the 'hmce' combination.
    scale = temperature / base_temperature
    l_coarse = -scale * jnp.mean(mlpp_c)     # loss.view(anchor_count, bsz).mean() == mean over N
    l_fine = -scale * jnp.mean(mlpp_f)
    #   l=0: cum += (1/2^0) * max(-inf, l_coarse) = l_coarse
    #   l=1: cum += (1/2^1) * max(l_coarse, l_fine)
    return l_coarse + 0.5 * jnp.maximum(l_coarse, l_fine)


def _label_mask(labels):
    labels = _as_2d_int32(labels)
    eq = labels[:, None, :] == labels[None, :, :]
    return jnp.all(eq, axis=2).astype(jnp.float32)


def _hmlc_loss_ref(features, coarse_labels, fine_grained_labels,
                   temperature=1.0, base_temperature=1.0):
    """Pure-JAX reference mirroring the PyTorch code (for verification)."""
    b, v, d = features.shape
    n = v * b
    feat = jnp.swapaxes(features, 0, 1).reshape(n, d).astype(jnp.float32)
    adc = (feat @ feat.T) / temperature
    logits = adc - jnp.max(adc, axis=1, keepdims=True)
    logits_mask = 1.0 - jnp.eye(n, dtype=jnp.float32)
    exp_logits = jnp.exp(logits) * logits_mask
    log_prob = logits - jnp.log(jnp.sum(exp_logits, axis=1, keepdims=True))

    def layer(labels):
        m = jnp.tile(_label_mask(labels), (v, v)) * logits_mask
        mlpp = jnp.sum(m * log_prob, axis=1) / (jnp.sum(m, axis=1) + 1e-6)
        return jnp.mean(-(temperature / base_temperature) * mlpp)

    l0 = layer(coarse_labels)
    l1 = layer(fine_grained_labels)
    return l0 + 0.5 * jnp.maximum(l0, l1)


if __name__ == "__main__":
    key = jax.random.PRNGKey(0)
    k_feat, k_coarse, k_fine = jax.random.split(key, 3)

    # --- small test (single row tile) ---
    B, V, D, L = 8, 2, 32, 3   # batch, n_views, feature dim, label-vector length

    features = jax.random.normal(k_feat, (B, V, D), dtype=jnp.float32)
    # L2-normalize features like typical SupCon usage (not required for correctness).
    features = features / jnp.linalg.norm(features, axis=-1, keepdims=True)

    coarse_labels = jax.random.randint(k_coarse, (B, L), 0, 2, dtype=jnp.int32)
    fine_grained_labels = jax.random.randint(k_fine, (B, L), 0, 4, dtype=jnp.int32)

    loss = hmlc_loss(features, coarse_labels, fine_grained_labels)
    loss = jax.block_until_ready(loss)

    ref = _hmlc_loss_ref(features, coarse_labels, fine_grained_labels)
    assert jnp.allclose(loss, ref, rtol=1e-4, atol=1e-5), (loss, ref)

    # --- larger test (multiple row tiles, last tile partial) ---
    B2 = 192                  # N = 384 -> grid of 2 row tiles (256 + 128-valid partial tile)
    k2f, k2c, k2g = jax.random.split(jax.random.PRNGKey(1), 3)
    feats2 = jax.random.normal(k2f, (B2, V, D), dtype=jnp.float32)
    feats2 = feats2 / jnp.linalg.norm(feats2, axis=-1, keepdims=True)
    coarse2 = jax.random.randint(k2c, (B2, L), 0, 3, dtype=jnp.int32)
    fine2 = jax.random.randint(k2g, (B2, L), 0, 6, dtype=jnp.int32)

    loss2 = jax.block_until_ready(hmlc_loss(feats2, coarse2, fine2))
    ref2 = _hmlc_loss_ref(feats2, coarse2, fine2)
    assert jnp.allclose(loss2, ref2, rtol=1e-3, atol=1e-4), (loss2, ref2)

    print("KERNEL_OK")
</pallas_src>

<mosaic_0001>
module attributes {stable_mosaic.version = 11 : i64} {
  func.func @_hmlc_kernel(%arg0: i32, %arg1: memref<16x3xi32, #tpu.memory_space<vmem>>, %arg2: memref<16x3xi32, #tpu.memory_space<vmem>>, %arg3: memref<3x16xi32, #tpu.memory_space<vmem>>, %arg4: memref<3x16xi32, #tpu.memory_space<vmem>>, %arg5: memref<16x32xf32, #tpu.memory_space<vmem>>, %arg6: memref<16x32xf32, #tpu.memory_space<vmem>>, %arg7: memref<16x1xf32, #tpu.memory_space<vmem>>, %arg8: memref<16x1xf32, #tpu.memory_space<vmem>>) attributes {dimension_semantics = [#tpu.dimension_semantics<parallel>], iteration_bounds = array<i64: 1>, scalar_prefetch = 0 : i64, scratch_operands = 0 : i64, tpu.core_type = #tpu.core_type<tc>, window_params = [{transform_indices = @transform_0, window_bounds = array<i64: 16, 3>}, {transform_indices = @transform_1, window_bounds = array<i64: 16, 3>}, {pipeline_mode = #tpu.pipeline_mode<synchronous>, transform_indices = @transform_2, window_bounds = array<i64: 3, 16>}, {pipeline_mode = #tpu.pipeline_mode<synchronous>, transform_indices = @transform_3, window_bounds = array<i64: 3, 16>}, {transform_indices = @transform_4, window_bounds = array<i64: 16, 32>}, {pipeline_mode = #tpu.pipeline_mode<synchronous>, transform_indices = @transform_5, window_bounds = array<i64: 16, 32>}, {transform_indices = @transform_6, window_bounds = array<i64: 16, 1>}, {transform_indices = @transform_7, window_bounds = array<i64: 16, 1>}]} {
    %c0 = arith.constant 0 : index
    %c0_0 = arith.constant 0 : index
    %0 = vector.load %arg5[%c0, %c0_0] : memref<16x32xf32, #tpu.memory_space<vmem>>, vector<16x32xf32>
    %c0_1 = arith.constant 0 : index
    %c0_2 = arith.constant 0 : index
    %1 = vector.load %arg6[%c0_1, %c0_2] : memref<16x32xf32, #tpu.memory_space<vmem>>, vector<16x32xf32>
    %cst = arith.constant 1.000000e+00 : f32
    %2 = vector.broadcast %cst : f32 to vector<16x32xf32>
    %3 = arith.mulf %0, %2 : vector<16x32xf32>
    %cst_3 = arith.constant dense<0.000000e+00> : vector<16x16xf32>
    %4 = tpu.matmul %3, %1, %cst_3 {dimension_numbers = #tpu.dot_dimension_numbers<[1], [1], [0], [0], [0, 0, 1, 0], [], []>} : vector<16x32xf32>, vector<16x32xf32>, vector<16x16xf32> -> vector<16x16xf32>
    %cst_4 = arith.constant dense<0xFF800000> : vector<16xf32>
    %5 = vector.multi_reduction <maximumf>, %4, %cst_4 [1] : vector<16x16xf32> to vector<16xf32>
    %6 = vector.shape_cast %5 : vector<16xf32> to vector<16x1xf32>
    %7 = vector.broadcast %6 : vector<16x1xf32> to vector<16x16xf32>
    %8 = arith.subf %4, %7 : vector<16x16xf32>
    %9 = arith.mulf %3, %0 : vector<16x32xf32>
    %cst_5 = arith.constant dense<0.000000e+00> : vector<16xf32>
    %10 = vector.multi_reduction <add>, %9, %cst_5 [1] : vector<16x32xf32> to vector<16xf32>
    %11 = vector.shape_cast %10 : vector<16xf32> to vector<16x1xf32>
    %12 = arith.subf %11, %6 : vector<16x1xf32>
    %13 = math.exp %8 : vector<16x16xf32>
    %cst_6 = arith.constant dense<0.000000e+00> : vector<16xf32>
    %14 = vector.multi_reduction <add>, %13, %cst_6 [1] : vector<16x16xf32> to vector<16xf32>
    %15 = vector.shape_cast %14 : vector<16xf32> to vector<16x1xf32>
    %16 = math.exp %12 : vector<16x1xf32>
    %17 = arith.subf %15, %16 : vector<16x1xf32>
    %18 = math.log %17 : vector<16x1xf32>
    %c0_7 = arith.constant 0 : index
    %c0_8 = arith.constant 0 : index
    %19 = vector.load %arg1[%c0_7, %c0_8] : memref<16x3xi32, #tpu.memory_space<vmem>>, vector<16x1xi32>
    %c0_9 = arith.constant 0 : index
    %c0_10 = arith.constant 0 : index
    %20 = vector.load %arg3[%c0_9, %c0_10] : memref<3x16xi32, #tpu.memory_space<vmem>>, vector<1x16xi32>
    %21 = vector.broadcast %19 : vector<16x1xi32> to vector<16x16xi32>
    %22 = vector.broadcast %20 : vector<1x16xi32> to vector<16x16xi32>
    %23 = arith.cmpi eq, %21, %22 : vector<16x16xi32>
    %c0_11 = arith.constant 0 : index
    %c1 = arith.constant 1 : index
    %24 = vector.load %arg1[%c0_11, %c1] : memref<16x3xi32, #tpu.memory_space<vmem>>, vector<16x1xi32>
    %c1_12 = arith.constant 1 : index
    %c0_13 = arith.constant 0 : index
    %25 = vector.load %arg3[%c1_12, %c0_13] : memref<3x16xi32, #tpu.memory_space<vmem>>, vector<1x16xi32>
    %26 = vector.broadcast %24 : vector<16x1xi32> to vector<16x16xi32>
    %27 = vector.broadcast %25 : vector<1x16xi32> to vector<16x16xi32>
    %28 = arith.cmpi eq, %26, %27 : vector<16x16xi32>
    %29 = arith.andi %23, %28 : vector<16x16xi1>
    %c0_14 = arith.constant 0 : index
    %c2 = arith.constant 2 : index
    %30 = vector.load %arg1[%c0_14, %c2] : memref<16x3xi32, #tpu.memory_space<vmem>>, vector<16x1xi32>
    %c2_15 = arith.constant 2 : index
    %c0_16 = arith.constant 0 : index
    %31 = vector.load %arg3[%c2_15, %c0_16] : memref<3x16xi32, #tpu.memory_space<vmem>>, vector<1x16xi32>
    %32 = vector.broadcast %30 : vector<16x1xi32> to vector<16x16xi32>
    %33 = vector.broadcast %31 : vector<1x16xi32> to vector<16x16xi32>
    %34 = arith.cmpi eq, %32, %33 : vector<16x16xi32>
    %35 = arith.andi %29, %34 : vector<16x16xi1>
    %36 = arith.extui %35 : vector<16x16xi1> to vector<16x16xi32>
    %37 = arith.sitofp %36 : vector<16x16xi32> to vector<16x16xf32>
    %cst_17 = arith.constant dense<0.000000e+00> : vector<16xf32>
    %38 = vector.multi_reduction <add>, %37, %cst_17 [1] : vector<16x16xf32> to vector<16xf32>
    %39 = vector.shape_cast %38 : vector<16xf32> to vector<16x1xf32>
    %cst_18 = arith.constant 1.000000e+00 : f32
    %40 = vector.broadcast %cst_18 : f32 to vector<16x1xf32>
    %41 = arith.subf %39, %40 : vector<16x1xf32>
    %cst_19 = arith.constant 0.000000e+00 : f32
    %42 = vector.broadcast %cst_19 : f32 to vector<16x16xf32>
    %43 = arith.select %35, %8, %42 : vector<16x16xi1>, vector<16x16xf32>
    %cst_20 = arith.constant dense<0.000000e+00> : vector<16xf32>
    %44 = vector.multi_reduction <add>, %43, %cst_20 [1] : vector<16x16xf32> to vector<16xf32>
    %45 = vector.shape_cast %44 : vector<16xf32> to vector<16x1xf32>
    %46 = arith.subf %45, %12 : vector<16x1xf32>
    %47 = arith.mulf %18, %41 : vector<16x1xf32>
    %48 = arith.subf %46, %47 : vector<16x1xf32>
    %cst_21 = arith.constant 9.99999997E-7 : f32
    %49 = vector.broadcast %cst_21 : f32 to vector<16x1xf32>
    %50 = arith.addf %41, %49 : vector<16x1xf32>
    %51 = arith.divf %48, %50 : vector<16x1xf32>
    %c0_22 = arith.constant 0 : index
    %c0_23 = arith.constant 0 : index
    %52 = vector.load %arg7[%c0_22, %c0_23] : memref<16x1xf32, #tpu.memory_space<vmem>>, vector<16x1xf32>
    tpu.vector_store %arg7[%c0_22, %c0_23], %51 {strides = array<i32>} : memref<16x1xf32, #tpu.memory_space<vmem>>, vector<16x1xf32>,
    %c0_24 = arith.constant 0 : index
    %c0_25 = arith.constant 0 : index
    %53 = vector.load %arg2[%c0_24, %c0_25] : memref<16x3xi32, #tpu.memory_space<vmem>>, vector<16x1xi32>
    %c0_26 = arith.constant 0 : index
    %c0_27 = arith.constant 0 : index
    %54 = vector.load %arg4[%c0_26, %c0_27] : memref<3x16xi32, #tpu.memory_space<vmem>>, vector<1x16xi32>
    %55 = vector.broadcast %53 : vector<16x1xi32> to vector<16x16xi32>
    %56 = vector.broadcast %54 : vector<1x16xi32> to vector<16x16xi32>
    %57 = arith.cmpi eq, %55, %56 : vector<16x16xi32>
    %c0_28 = arith.constant 0 : index
    %c1_29 = arith.constant 1 : index
    %58 = vector.load %arg2[%c0_28, %c1_29] : memref<16x3xi32, #tpu.memory_space<vmem>>, vector<16x1xi32>
    %c1_30 = arith.constant 1 : index
    %c0_31 = arith.constant 0 : index
    %59 = vector.load %arg4[%c1_30, %c0_31] : memref<3x16xi32, #tpu.memory_space<vmem>>, vector<1x16xi32>
    %60 = vector.broadcast %58 : vector<16x1xi32> to vector<16x16xi32>
    %61 = vector.broadcast %59 : vector<1x16xi32> to vector<16x16xi32>
    %62 = arith.cmpi eq, %60, %61 : vector<16x16xi32>
    %63 = arith.andi %57, %62 : vector<16x16xi1>
    %c0_32 = arith.constant 0 : index
    %c2_33 = arith.constant 2 : index
    %64 = vector.load %arg2[%c0_32, %c2_33] : memref<16x3xi32, #tpu.memory_space<vmem>>, vector<16x1xi32>
    %c2_34 = arith.constant 2 : index
    %c0_35 = arith.constant 0 : index
    %65 = vector.load %arg4[%c2_34, %c0_35] : memref<3x16xi32, #tpu.memory_space<vmem>>, vector<1x16xi32>
    %66 = vector.broadcast %64 : vector<16x1xi32> to vector<16x16xi32>
    %67 = vector.broadcast %65 : vector<1x16xi32> to vector<16x16xi32>
    %68 = arith.cmpi eq, %66, %67 : vector<16x16xi32>
    %69 = arith.andi %63, %68 : vector<16x16xi1>
    %70 = arith.extui %69 : vector<16x16xi1> to vector<16x16xi32>
    %71 = arith.sitofp %70 : vector<16x16xi32> to vector<16x16xf32>
    %cst_36 = arith.constant dense<0.000000e+00> : vector<16xf32>
    %72 = vector.multi_reduction <add>, %71, %cst_36 [1] : vector<16x16xf32> to vector<16xf32>
    %73 = vector.shape_cast %72 : vector<16xf32> to vector<16x1xf32>
    %cst_37 = arith.constant 1.000000e+00 : f32
    %74 = vector.broadcast %cst_37 : f32 to vector<16x1xf32>
    %75 = arith.subf %73, %74 : vector<16x1xf32>
    %cst_38 = arith.constant 0.000000e+00 : f32
    %76 = vector.broadcast %cst_38 : f32 to vector<16x16xf32>
    %77 = arith.select %69, %8, %76 : vector<16x16xi1>, vector<16x16xf32>
    %cst_39 = arith.constant dense<0.000000e+00> : vector<16xf32>
    %78 = vector.multi_reduction <add>, %77, %cst_39 [1] : vector<16x16xf32> to vector<16xf32>
    %79 = vector.shape_cast %78 : vector<16xf32> to vector<16x1xf32>
    %80 = arith.subf %79, %12 : vector<16x1xf32>
    %81 = arith.mulf %18, %75 : vector<16x1xf32>
    %82 = arith.subf %80, %81 : vector<16x1xf32>
    %cst_40 = arith.constant 9.99999997E-7 : f32
    %83 = vector.broadcast %cst_40 : f32 to vector<16x1xf32>
    %84 = arith.addf %75, %83 : vector<16x1xf32>
    %85 = arith.divf %82, %84 : vector<16x1xf32>
    %c0_41 = arith.constant 0 : index
    %c0_42 = arith.constant 0 : index
    %86 = vector.load %arg8[%c0_41, %c0_42] : memref<16x1xf32, #tpu.memory_space<vmem>>, vector<16x1xf32>
    tpu.vector_store %arg8[%c0_41, %c0_42], %85 {strides = array<i32>} : memref<16x1xf32, #tpu.memory_space<vmem>>, vector<16x1xf32>,
    return
  }
  func.func @transform_0(%arg0: i32) -> (i32, i32) {
    %c0_i32 = arith.constant 0 : i32
    %c0_i32_0 = arith.constant 0 : i32
    return %arg0, %c0_i32 : i32, i32
  }
  func.func @transform_1(%arg0: i32) -> (i32, i32) {
    %c0_i32 = arith.constant 0 : i32
    %c0_i32_0 = arith.constant 0 : i32
    return %arg0, %c0_i32 : i32, i32
  }
  func.func @transform_2(%arg0: i32) -> (i32, i32) {
    %c0_i32 = arith.constant 0 : i32
    %c0_i32_0 = arith.constant 0 : i32
    %c0_i32_1 = arith.constant 0 : i32
    return %c0_i32, %c0_i32_0 : i32, i32
  }
  func.func @transform_3(%arg0: i32) -> (i32, i32) {
    %c0_i32 = arith.constant 0 : i32
    %c0_i32_0 = arith.constant 0 : i32
    %c0_i32_1 = arith.constant 0 : i32
    return %c0_i32, %c0_i32_0 : i32, i32
  }
  func.func @transform_4(%arg0: i32) -> (i32, i32) {
    %c0_i32 = arith.constant 0 : i32
    %c0_i32_0 = arith.constant 0 : i32
    return %arg0, %c0_i32 : i32, i32
  }
  func.func @transform_5(%arg0: i32) -> (i32, i32) {
    %c0_i32 = arith.constant 0 : i32
    %c0_i32_0 = arith.constant 0 : i32
    %c0_i32_1 = arith.constant 0 : i32
    return %c0_i32, %c0_i32_0 : i32, i32
  }
  func.func @transform_6(%arg0: i32) -> (i32, i32) {
    %c0_i32 = arith.constant 0 : i32
    %c0_i32_0 = arith.constant 0 : i32
    return %arg0, %c0_i32 : i32, i32
  }
  func.func @transform_7(%arg0: i32) -> (i32, i32) {
    %c0_i32 = arith.constant 0 : i32
    %c0_i32_0 = arith.constant 0 : i32
    return %arg0, %c0_i32 : i32, i32
  }
}

</mosaic_0001>

<llo_original>
// kernel: tpu_custom_call.1
$region0: #{tpu_custom_call.1}
  #allocation0 [shape = 'u32[]', space=smem, size = 0x4, offset = 0x4, fixed_abs, tag = 'smem constant byte address 0x4 - core index']
  #allocation1 [shape = 'u32[144,128]{1,0:T(1,128)}', space=vmem, size = 0x12000, scoped, tag = 'internal scratch']
  %s0 = inlined_call_operand.vmem [shape: s32[16,3], index: 0, kind: input, shape index: {}]
  %s1 = inlined_call_operand.vmem [shape: s32[16,3], index: 1, kind: input, shape index: {}]
  %s2 = inlined_call_operand.vmem [shape: s32[3,16], index: 2, kind: input, shape index: {}]
  %s3 = inlined_call_operand.vmem [shape: s32[3,16], index: 3, kind: input, shape index: {}]
  %s4 = inlined_call_operand.vmem [shape: f32[16,32], index: 4, kind: input, shape index: {}]
  %s5 = inlined_call_operand.vmem [shape: f32[16,32], index: 5, kind: input, shape index: {}]
  %s6 = inlined_call_operand.vmem [shape: f32[16,1], index: 6, kind: output, shape index: {0}]
  %s7 = inlined_call_operand.vmem [shape: f32[16,1], index: 7, kind: output, shape index: {1}]
  %8 = xla_tuple %s6, %s7
  %s9 = sld [smem:[#allocation0]]
  $region42: #{tpu_custom_call.1} parent=0
    _
  %s11 = ssub.s32 1, %s9
  %s12 = scalar_select 0, %s11, %s9
  // Predicated region
  $region2: #{tpu_custom_call.1} parent=0 // pred_check
    _
  $region3: #{tpu_custom_call.1} parent=0 // pred_check_branch
    %14 = sbr.rel (0) target = $region5
  $region4: #{tpu_custom_call.1} parent=0 // pred_region
    _
  $region5: #{tpu_custom_call.1} parent=0 // pred_fallthru
    _
  // Predicated region
  $region6: #{tpu_custom_call.1} parent=0 // pred_check
    _
  $region7: #{tpu_custom_call.1} parent=0 // pred_check_branch
    %16 = sbr.rel (0) target = $region9
  $region8: #{tpu_custom_call.1} parent=0 // pred_region
    _
  $region9: #{tpu_custom_call.1} parent=0 // pred_fallthru
    _
  // Predicated region
  $region10: #{tpu_custom_call.1} parent=0 // pred_check
    _
  $region11: #{tpu_custom_call.1} parent=0 // pred_check_branch
    %18 = sbr.rel (0) target = $region13
  $region12: #{tpu_custom_call.1} parent=0 // pred_region
    _
  $region13: #{tpu_custom_call.1} parent=0 // pred_fallthru
    _
  // Predicated region
  $region14: #{tpu_custom_call.1} parent=0 // pred_check
    _
  $region15: #{tpu_custom_call.1} parent=0 // pred_check_branch
    %20 = sbr.rel (0) target = $region17
  $region16: #{tpu_custom_call.1} parent=0 // pred_region
    _
  $region17: #{tpu_custom_call.1} parent=0 // pred_fallthru
    _
  // Predicated region
  $region18: #{tpu_custom_call.1} parent=0 // pred_check
    _
  $region19: #{tpu_custom_call.1} parent=0 // pred_check_branch
    %22 = sbr.rel (0) target = $region21
  $region20: #{tpu_custom_call.1} parent=0 // pred_region
    _
  $region21: #{tpu_custom_call.1} parent=0 // pred_fallthru
    _
  // Predicated region
  $region22: #{tpu_custom_call.1} parent=0 // pred_check
    _
  $region23: #{tpu_custom_call.1} parent=0 // pred_check_branch
    %24 = sbr.rel (0) target = $region25
  $region24: #{tpu_custom_call.1} parent=0 // pred_region
    _
  $region25: #{tpu_custom_call.1} parent=0 // pred_fallthru
    _
  %v25 = vld [vmem:[%s4] sm:$0xff]
  %v26 = vld [vmem:[%s4 + $0x8] sm:$0xff]
  %v27 = vld [vmem:[%s5] sm:$0xff]
  %v28 = vld [vmem:[%s5 + $0x8] sm:$0xff]
  %vm29 = vcmask 261120
  %v31 = vsel %vm29, %v25, 0
  %v34 = vsel %vm29, %v26, 0
  %v37 = vsel %vm29, %v27, 0
  %v40 = vsel %vm29, %v28, 0
  %42 = vmatprep.subr.mxu0 0.0
  %43 = vmatpush1.xpose.msra.mxu0 0.0
  %44 = vmatprep.subr.mxu0 0.0
  %45 = vmatpush1.xpose.msra.mxu0 0.0
  %46 = vmatprep.subr.mxu0 0.0
  %47 = vmatpush1.xpose.msra.mxu0 0.0
  %48 = vmatprep.subr.mxu0 0.0
  %49 = vmatpush1.xpose.msra.mxu0 0.0
  %50 = vmatprep.subr.mxu0 0.0
  %51 = vmatpush1.xpose.msra.mxu0 0.0
  %52 = vmatprep.subr.mxu0 0.0
  %53 = vmatpush1.xpose.msra.mxu0 0.0
  %54 = vmatprep.subr.mxu0 0.0
  %55 = vmatpush1.xpose.msra.mxu0 0.0
  %56 = vmatprep.subr.mxu0 0.0
  %57 = vmatpush1.xpose.msra.mxu0 0.0
  %58 = vmatprep.subr.mxu0 0.0
  %59 = vmatpush1.xpose.msra.mxu0 0.0
  %60 = vmatprep.subr.mxu0 0.0
  %61 = vmatpush1.xpose.msra.mxu0 0.0
  %62 = vmatprep.subr.mxu0 0.0
  %63 = vmatpush1.xpose.msra.mxu0 0.0
  %64 = vmatprep.subr.mxu0 0.0
  %65 = vmatpush1.xpose.msra.mxu0 0.0
  %66 = vmatprep.subr.mxu0 0.0
  %67 = vmatpush1.xpose.msra.mxu0 0.0
  %68 = vmatprep.subr.mxu0 0.0
  %69 = vmatpush1.xpose.msra.mxu0 0.0
  %70 = vmatprep.subr.mxu0 0.0
  %71 = vmatpush1.xpose.msra.mxu0 %v40
  %72 = vmatprep.subr.mxu0 0.0
  %73 = vmatpush1.xpose.msra.mxu0 %v37
  %74 = vmatprep.subr.mxu0 0.0
  %75 = vmatpush2.xpose.msra.mxu0 0.0
  %76 = vmatprep.subr.mxu0 0.0
  %77 = vmatpush2.xpose.msra.mxu0 0.0
  %78 = vmatprep.subr.mxu0 0.0
  %79 = vmatpush2.xpose.msra.mxu0 0.0
  %80 = vmatprep.subr.mxu0 0.0
  %81 = vmatpush2.xpose.msra.mxu0 0.0
  %82 = vmatprep.subr.mxu0 0.0
  %83 = vmatpush2.xpose.msra.mxu0 0.0
  %84 = vmatprep.subr.mxu0 0.0
  %85 = vmatpush2.xpose.msra.mxu0 0.0
  %86 = vmatprep.subr.mxu0 0.0
  %87 = vmatpush2.xpose.msra.mxu0 0.0
  %88 = vmatprep.subr.mxu0 0.0
  %89 = vmatpush2.xpose.msra.mxu0 0.0
  %90 = vmatprep.subr.mxu0 0.0
  %91 = vmatpush2.xpose.msra.mxu0 0.0
  %92 = vmatprep.subr.mxu0 0.0
  %93 = vmatpush2.xpose.msra.mxu0 0.0
  %94 = vmatprep.subr.mxu0 0.0
  %95 = vmatpush2.xpose.msra.mxu0 0.0
  %96 = vmatprep.subr.mxu0 0.0
  %97 = vmatpush2.xpose.msra.mxu0 0.0
  %98 = vmatprep.subr.mxu0 0.0
  %99 = vmatpush2.xpose.msra.mxu0 0.0
  %100 = vmatprep.subr.mxu0 0.0
  %101 = vmatpush2.xpose.msra.mxu0 0.0
  %102 = vmatprep.subr.mxu0 0.0
  %103 = vmatpush2.xpose.msra.mxu0 0.0
  %104 = vmatprep.subr.mxu0 0.0
  %105 = vmatpush2.xpose.msra.mxu0 0.0
  %106 = vmatprep.mubr.f32.mxu0 0.0
  %107 = vmatmul.mubr.f32.gmra.mxu0 %v31
  %v108 = vpop.f32.mrf.mxu0
  %v109 = vadd.f32 0.0, %v108
  %v110 = vpop.f32.mrf.mxu0
  %111 = vmatprep.mubr.f32.mxu0 0.0
  %112 = vmatmul.mubr.f32.gmra.mxu0 %v34
  %v113 = vpop.f32.mrf.mxu0
  %v114 = vadd.f32 0.0, %v113
  %v115 = vpop.f32.mrf.mxu0
  %116 = vdwg.mxu0
  %vm117 = vcmask 130048
  %v118 = vsel %vm117, %v109, -inf
  %119 = vmax.xlane.f32.xlu0 %v118
  %v120 = vpop.xlane.xlu0 %119
  %v121 = vsel %vm117, %v114, -inf
  %122 = vmax.xlane.f32.xlu0 %v121
  %v123 = vpop.xlane.xlu0 %122
  %v124 = vsub.f32 %v109, %v120
  %v125 = vsub.f32 %v114, %v123
  %v126 = vmul.f32 %v25, %v25
  %v127 = vmul.f32 %v26, %v26
  %v128 = vsel %vm29, %v126, 0.0
  %129 = vadd.xlane.f32.xlu0 %v128
  %v130 = vpop.xlane.xlu0 %129
  %v131 = vsel %vm29, %v127, 0.0
  %132 = vadd.xlane.f32.xlu0 %v131
  %v133 = vpop.xlane.xlu0 %132
  %v134 = vsub.f32 %v130, %v120
  %v135 = vsub.f32 %v133, %v123
  %v136 = vmul.f32 %v124, 1.442695
  %v137 = vpow.pop %v136
  %v138 = vmul.f32 %v125, 1.442695
  %v139 = vpow.pop %v138
  %v140 = vsel %vm117, %v137, 0.0
  %141 = vadd.xlane.f32.xlu0 %v140
  %v142 = vpop.xlane.xlu0 %141
  %v143 = vsel %vm117, %v139, 0.0
  %144 = vadd.xlane.f32.xlu0 %v143
  %v145 = vpop.xlane.xlu0 %144
  %v146 = vmul.f32 %v134, 1.442695
  %v147 = vpow.pop %v146
  %v148 = vmul.f32 %v135, 1.442695
  %v149 = vpow.pop %v148
  %v150 = vsub.f32 %v142, %v147
  %v151 = vsub.f32 %v145, %v149
  %v152 = vlog2.pop %v150
  %v153 = vmul.f32 %v152, 0.6931472
  %v154 = vlog2.pop %v151
  %v155 = vmul.f32 %v154, 0.6931472
  %v156 = vld [vmem:[%s0] sm:$0xff]
  %v157 = vld [vmem:[%s0 + $0x8] sm:$0xff]
  %v158 = vld [vmem:[%s2] sm:$0x1]
  %159 = vset.pattern.permute.xlu0 0
  %160 = vperm.xlu0 %159, %v156
  %v161 = vpop.permute.xlu0 %160
  %162 = vset.pattern.permute.xlu0 0
  %163 = vperm.xlu0 %162, %v157
  %v164 = vpop.permute.xlu0 %163
  %v165 = vlaneseq
  %v166 = vshrl.u32 %v165, 7
  %v167 = vsub.s32 0, %v166
  %v168 = vrot.slane %v158, %v167
  %vm169 = vcmp.eq.s32.totalorder %v161, %v168
  %vm170 = vcmp.eq.s32.totalorder %v164, %v168
  %v171 = vld [vmem:[%s2 + $0x1] sm:$0x1]
  %172 = vset.pattern.permute.xlu0 1
  %173 = vperm.xlu0 %172, %v156
  %v174 = vpop.permute.xlu0 %173
  %175 = vset.pattern.permute.xlu0 1
  %176 = vperm.xlu0 %175, %v157
  %v177 = vpop.permute.xlu0 %176
  %v178 = vlaneseq
  %v179 = vshrl.u32 %v178, 7
  %v180 = vsub.s32 0, %v179
  %v181 = vrot.slane %v171, %v180
  %vm182 = vcmp.eq.s32.totalorder %v174, %v181
  %vm183 = vcmp.eq.s32.totalorder %v177, %v181
  %vm184 = vmand %vm169, %vm182
  %vm185 = vmand %vm170, %vm183
  %v186 = vld [vmem:[%s2 + $0x2] sm:$0x1]
  %187 = vset.pattern.permute.xlu0 2
  %188 = vperm.xlu0 %187, %v156
  %v189 = vpop.permute.xlu0 %188
  %190 = vset.pattern.permute.xlu0 2
  %191 = vperm.xlu0 %190, %v157
  %v192 = vpop.permute.xlu0 %191
  %v193 = vlaneseq
  %v194 = vshrl.u32 %v193, 7
  %v195 = vsub.s32 0, %v194
  %v196 = vrot.slane %v186, %v195
  %vm197 = vcmp.eq.s32.totalorder %v189, %v196
  %vm198 = vcmp.eq.s32.totalorder %v192, %v196
  %vm199 = vmand %vm184, %vm197
  %vm200 = vmand %vm185, %vm198
  %v201 = vsel %vm199, 1, 0
  %v202 = vsel %vm200, 1, 0
  %v203 = vcvt.s32.f32 %v201
  %v204 = vcvt.s32.f32 %v202
  %v205 = vsel %vm117, %v203, 0.0
  %206 = vadd.xlane.f32.xlu0 %v205
  %v207 = vpop.xlane.xlu0 %206
  %v208 = vsel %vm117, %v204, 0.0
  %209 = vadd.xlane.f32.xlu0 %v208
  %v210 = vpop.xlane.xlu0 %209
  %v211 = vsub.f32 %v207, 1.0
  %v212 = vsub.f32 %v210, 1.0
  %v213 = vsel %vm199, %v124, 0.0
  %v214 = vsel %vm200, %v125, 0.0
  %v215 = vsel %vm117, %v213, 0.0
  %216 = vadd.xlane.f32.xlu0 %v215
  %v217 = vpop.xlane.xlu0 %216
  %v218 = vsel %vm117, %v214, 0.0
  %219 = vadd.xlane.f32.xlu0 %v218
  %v220 = vpop.xlane.xlu0 %219
  %v221 = vsub.f32 %v217, %v134
  %v222 = vsub.f32 %v220, %v135
  %v223 = vmul.f32 %v153, %v211
  %v224 = vmul.f32 %v155, %v212
  %v225 = vsub.f32 %v221, %v223
  %v226 = vsub.f32 %v222, %v224
  %v227 = vadd.f32 %v211, 1e-06
  %v228 = vadd.f32 %v212, 1e-06
  %v229 = vrcp.pop %v227
  %v230 = vmul.f32 %v225, %v229
  %v231 = vrcp.pop %v228
  %v232 = vmul.f32 %v226, %v231
  %vm233 = vcmask 7168
  %234 = vst.msk [vmem:[%s6] sm:$0xff] %vm233, %v230
  %235 = vst.msk [vmem:[%s6 + $0x8] sm:$0xff] %vm233, %v232
  %v236 = vld [vmem:[%s1] sm:$0xff]
  %v237 = vld [vmem:[%s1 + $0x8] sm:$0xff]
  %v238 = vld [vmem:[%s3] sm:$0x1]
  %239 = vset.pattern.permute.xlu0 0
  %240 = vperm.xlu0 %239, %v236
  %v241 = vpop.permute.xlu0 %240
  %242 = vset.pattern.permute.xlu0 0
  %243 = vperm.xlu0 %242, %v237
  %v244 = vpop.permute.xlu0 %243
  %v245 = vlaneseq
  %v246 = vshrl.u32 %v245, 7
  %v247 = vsub.s32 0, %v246
  %v248 = vrot.slane %v238, %v247
  %vm249 = vcmp.eq.s32.totalorder %v241, %v248
  %vm250 = vcmp.eq.s32.totalorder %v244, %v248
  %v251 = vld [vmem:[%s3 + $0x1] sm:$0x1]
  %252 = vset.pattern.permute.xlu0 1
  %253 = vperm.xlu0 %252, %v236
  %v254 = vpop.permute.xlu0 %253
  %255 = vset.pattern.permute.xlu0 1
  %256 = vperm.xlu0 %255, %v237
  %v257 = vpop.permute.xlu0 %256
  %v258 = vlaneseq
  %v259 = vshrl.u32 %v258, 7
  %v260 = vsub.s32 0, %v259
  %v261 = vrot.slane %v251, %v260
  %vm262 = vcmp.eq.s32.totalorder %v254, %v261
  %vm263 = vcmp.eq.s32.totalorder %v257, %v261
  %vm264 = vmand %vm249, %vm262
  %vm265 = vmand %vm250, %vm263
  %v266 = vld [vmem:[%s3 + $0x2] sm:$0x1]
  %267 = vset.pattern.permute.xlu0 2
  %268 = vperm.xlu0 %267, %v236
  %v269 = vpop.permute.xlu0 %268
  %270 = vset.pattern.permute.xlu0 2
  %271 = vperm.xlu0 %270, %v237
  %v272 = vpop.permute.xlu0 %271
  %v273 = vlaneseq
  %v274 = vshrl.u32 %v273, 7
  %v275 = vsub.s32 0, %v274
  %v276 = vrot.slane %v266, %v275
  %vm277 = vcmp.eq.s32.totalorder %v269, %v276
  %vm278 = vcmp.eq.s32.totalorder %v272, %v276
  %vm279 = vmand %vm264, %vm277
  %vm280 = vmand %vm265, %vm278
  %v281 = vsel %vm279, 1, 0
  %v282 = vsel %vm280, 1, 0
  %v283 = vcvt.s32.f32 %v281
  %v284 = vcvt.s32.f32 %v282
  %v285 = vsel %vm117, %v283, 0.0
  %286 = vadd.xlane.f32.xlu0 %v285
  %v287 = vpop.xlane.xlu0 %286
  %v288 = vsel %vm117, %v284, 0.0
  %289 = vadd.xlane.f32.xlu0 %v288
  %v290 = vpop.xlane.xlu0 %289
  %v291 = vsub.f32 %v287, 1.0
  %v292 = vsub.f32 %v290, 1.0
  %v293 = vsel %vm279, %v124, 0.0
  %v294 = vsel %vm280, %v125, 0.0
  %v295 = vsel %vm117, %v293, 0.0
  %296 = vadd.xlane.f32.xlu0 %v295
  %v297 = vpop.xlane.xlu0 %296
  %v298 = vsel %vm117, %v294, 0.0
  %299 = vadd.xlane.f32.xlu0 %v298
  %v300 = vpop.xlane.xlu0 %299
  %v301 = vsub.f32 %v297, %v134
  %v302 = vsub.f32 %v300, %v135
  %v303 = vmul.f32 %v153, %v291
  %v304 = vmul.f32 %v155, %v292
  %v305 = vsub.f32 %v301, %v303
  %v306 = vsub.f32 %v302, %v304
  %v307 = vadd.f32 %v291, 1e-06
  %v308 = vadd.f32 %v292, 1e-06
  %v309 = vrcp.pop %v307
  %v310 = vmul.f32 %v305, %v309
  %v311 = vrcp.pop %v308
  %v312 = vmul.f32 %v306, %v311
  %313 = vst.msk [vmem:[%s7] sm:$0xff] %vm233, %v310
  %314 = vst.msk [vmem:[%s7 + $0x8] sm:$0xff] %vm233, %v312
  // Predicated region
  $region26: #{tpu_custom_call.1} parent=0 // pred_check
    _
  $region27: #{tpu_custom_call.1} parent=0 // pred_check_branch
    %316 = sbr.rel (0) target = $region29
  $region28: #{tpu_custom_call.1} parent=0 // pred_region
    _
  $region29: #{tpu_custom_call.1} parent=0 // pred_fallthru
    _
  // Predicated region
  $region30: #{tpu_custom_call.1} parent=0 // pred_check
    _
  $region31: #{tpu_custom_call.1} parent=0 // pred_check_branch
    %318 = sbr.rel (0) target = $region33
  $region32: #{tpu_custom_call.1} parent=0 // pred_region
    _
  $region33: #{tpu_custom_call.1} parent=0 // pred_fallthru
    _
  // Predicated region
  $region34: #{tpu_custom_call.1} parent=0 // pred_check
    _
  $region35: #{tpu_custom_call.1} parent=0 // pred_check_branch
    %320 = sbr.rel (0) target = $region37
  $region36: #{tpu_custom_call.1} parent=0 // pred_region
    _
  $region37: #{tpu_custom_call.1} parent=0 // pred_fallthru
    _
  // Predicated region
  $region38: #{tpu_custom_call.1} parent=0 // pred_check
    _
  $region39: #{tpu_custom_call.1} parent=0 // pred_check_branch
    %322 = sbr.rel (0) target = $region41
  $region40: #{tpu_custom_call.1} parent=0 // pred_region
    _
  $region41: #{tpu_custom_call.1} parent=0 // pred_fallthru
    _

</llo_original>
